<compile_context>
chip_gen: v7x
topology: tpu7x:2x2x1
jax: 0.10.0
libtpu: 0.0.40
codegen_flags: <defaults>
</compile_context>

<pallas_src>
import numpy as np
import jax
import jax.numpy as jnp
from jax.experimental import pallas as pl
from jax.experimental.pallas import tpu as pltpu


def _round_up(x, m):
    return (x + m - 1) // m * m


def _choose_tile_m(M, tile_m):
    rows = _round_up(M, 128)
    tm = max(128, min(tile_m, rows))
    # Keep at least 2 grid steps whenever M allows so the "parallel" M axis can
    # actually split across both TensorCores on v7x.
    half = _round_up(max(rows // 2, 128), 128)
    if rows >= 256 and tm > half:
        tm = half
    return tm


# ---------------------------------------------------------------------------
# Kernel 1: autoencoder forward + per-patch reconstruction MSE (tiled over M)
# ---------------------------------------------------------------------------
def ae_mse_kernel(p_ref, w1_ref, b1_ref, w2_ref, b2_ref, err_ref):
    p_bf = p_ref[...]                                                   # (TM, D) bf16
    # Encoder / decoder on the MXU, f32 accumulation; biases added in f32.
    h = jnp.dot(p_bf, w1_ref[...], preferred_element_type=jnp.float32) + b1_ref[...]
    h = jnp.maximum(h, 0.0)                                             # ReLU (f32)
    y = jnp.dot(h.astype(jnp.bfloat16), w2_ref[...],
                preferred_element_type=jnp.float32) + b2_ref[...]       # (TM, D) f32
    d = p_bf.astype(jnp.float32) - y                                    # residual, f32
    err_ref[...] = jnp.mean(d * d, axis=1)[None, :]                     # lane-dense (1, TM)


def ae_mse(patches_bf16, w1, b1, w2, b2, *, tile_m):
    M_pad, D = patches_bf16.shape
    Hd = w1.shape[1]
    grid_m = M_pad // tile_m
    # VMEM budget from the chosen tile: double-buffered bf16 patch tile, resident
    # (double-buffered) weights/biases, f32 h/y/d intermediates, double-buffered
    # output rows.  1.5x headroom, clamped to [16 MiB, 48 MiB] (v7x has 64 MiB).
    vmem_bytes = (
        2 * tile_m * D * 2
        + 2 * (D * Hd * 2 + Hd * 4 + Hd * D * 2 + D * 4)
        + tile_m * (Hd * 4 + 2 * D * 4 + 4)
        + 2 * tile_m * 4
    )
    vmem_limit = int(min(max(vmem_bytes * 3 // 2, 16 << 20), 48 << 20))
    return pl.pallas_call(
        ae_mse_kernel,
        out_shape=jax.ShapeDtypeStruct((grid_m, tile_m), jnp.float32),
        grid=(grid_m,),
        in_specs=[
            pl.BlockSpec((tile_m, D), lambda i: (i, 0)),   # streamed patch tile
            # TODO(synk): pipeline_mode=pl.Buffered(1) on these constant-index
            # weight/bias specs would halve their (tiny) footprint on v7x.
            pl.BlockSpec((D, Hd), lambda i: (0, 0)),       # resident weights
            pl.BlockSpec((1, Hd), lambda i: (0, 0)),
            pl.BlockSpec((Hd, D), lambda i: (0, 0)),
            pl.BlockSpec((1, D), lambda i: (0, 0)),
        ],
        out_specs=pl.BlockSpec((1, tile_m), lambda i: (i, 0)),
        compiler_params=pltpu.CompilerParams(
            dimension_semantics=("parallel",),             # M-tiles independent
            vmem_limit_bytes=vmem_limit,
        ),
    )(patches_bf16, w1, b1, w2, b2)


# ---------------------------------------------------------------------------
# Kernel 2: bilinear resize, batched over N (one image per grid step).
#   out_n (H, W) = A (H, py) @ (E_n (py, px) @ B^T (px, W))
# ---------------------------------------------------------------------------
def resize_kernel(e_ref, a_ref, bt_ref, o_ref):
    t = jnp.dot(e_ref[...], bt_ref[...], preferred_element_type=jnp.float32)   # (py, W)
    o_ref[...] = jnp.dot(a_ref[...], t.astype(jnp.bfloat16),
                         preferred_element_type=jnp.float32)                   # (H, W)


def bilinear_resize(err_nyx_bf16, A_bf16, Bt_bf16):
    N, py, px = err_nyx_bf16.shape
    Hh = A_bf16.shape[0]
    Ww = Bt_bf16.shape[1]
    return pl.pallas_call(
        resize_kernel,
        out_shape=jax.ShapeDtypeStruct((N, Hh, Ww), jnp.float32),
        grid=(N,),
        in_specs=[
            pl.BlockSpec((None, py, px), lambda n: (n, 0, 0)),  # this image's error map
            pl.BlockSpec((Hh, py), lambda n: (0, 0)),           # resident row-interp matrix
            pl.BlockSpec((px, Ww), lambda n: (0, 0)),           # resident col-interp matrix^T
        ],
        out_specs=pl.BlockSpec((None, Hh, Ww), lambda n: (n, 0, 0)),
        compiler_params=pltpu.CompilerParams(
            dimension_semantics=("parallel",),                  # images independent
        ),
    )(err_nyx_bf16, A_bf16, Bt_bf16)


# ---------------------------------------------------------------------------
# Glue (plain JAX / numpy): patch extraction (torch .unfold semantics) and
# bilinear interpolation-matrix construction (align_corners=False).
# ---------------------------------------------------------------------------
def extract_patches(x, k, s):
    # x: (N, C, H, W) -> (N*py*px, C*k*k), matching
    # x.unfold(2,k,s).unfold(3,k,s).permute(0,2,3,1,4,5).reshape(-1, k*k*C)
    N, C, H, W = x.shape
    py = (H - k) // s + 1
    px = (W - k) // s + 1
    i_idx = (jnp.arange(py) * s)[:, None] + jnp.arange(k)[None, :]       # (py, k)
    j_idx = (jnp.arange(px) * s)[:, None] + jnp.arange(k)[None, :]       # (px, k)
    patches = x[:, :, i_idx[:, :, None, None], j_idx[None, None, :, :]]  # (N,C,py,k,px,k)
    patches = jnp.transpose(patches, (0, 2, 4, 1, 3, 5))                 # (N,py,px,C,k,k)
    return patches.reshape(N * py * px, C * k * k), py, px


def bilinear_matrix(in_size, out_size):
    # PyTorch bilinear interpolate, align_corners=False
    # (antialias is a no-op for upsampling, which is the case here).
    scale = in_size / out_size
    i = np.arange(out_size, dtype=np.float64)
    src = np.maximum((i + 0.5) * scale - 0.5, 0.0)
    i0 = np.minimum(np.floor(src).astype(np.int64), in_size - 1)
    i1 = np.minimum(i0 + 1, in_size - 1)
    w1 = src - i0
    w0 = 1.0 - w1
    A = np.zeros((out_size, in_size), dtype=np.float32)
    A[np.arange(out_size), i0] += w0.astype(np.float32)
    A[np.arange(out_size), i1] += w1.astype(np.float32)
    return A


def novelty_map(x, w1, b1, w2, b2, kernel_size, stride, *, tile_m=8192):
    N, C, H, W = x.shape
    # Cast upstream: the (k/s)^2-inflated unfold gather and the padded patch
    # matrix both move at bf16 width (the AE kernel consumes bf16 anyway).
    patches, py, px = extract_patches(x.astype(jnp.bfloat16), kernel_size, stride)
    M, D = patches.shape
    Hd = w1.shape[1]

    # ---- AE kernel operand prep ----------------------------------------
    tm = _choose_tile_m(M, tile_m)
    M_pad = _round_up(M, tm)
    patches_bf = jnp.pad(patches, ((0, M_pad - M), (0, 0)))              # (M_pad, D) bf16

    # Pad hidden dim to a full 128-lane vreg; zero pads are exact no-ops
    # (ReLU(0 + 0) = 0 and the matching rows of w2 are zero).  D stays unpadded.
    Hd_pad = _round_up(Hd, 128)
    w1_p = jnp.zeros((D, Hd_pad), jnp.bfloat16).at[:, :Hd].set(w1.astype(jnp.bfloat16))
    b1_p = jnp.zeros((1, Hd_pad), jnp.float32).at[:, :Hd].set(
        b1.reshape(1, Hd).astype(jnp.float32))
    w2_p = jnp.zeros((Hd_pad, D), jnp.bfloat16).at[:Hd, :].set(w2.astype(jnp.bfloat16))
    b2_p = b2.reshape(1, D).astype(jnp.float32)

    err = ae_mse(patches_bf, w1_p, b1_p, w2_p, b2_p, tile_m=tm)          # (M_pad//tm, tm)
    err = err.reshape(M_pad)[:M].reshape(N, py, px)                      # (N, py, px) f32

    # ---- bilinear resize: batched grid, bf16 MXU operands ---------------
    A = jnp.asarray(bilinear_matrix(py, H), jnp.bfloat16)                # (H, py)
    Bt = jnp.asarray(bilinear_matrix(px, W).T, jnp.bfloat16)             # (px, W)
    return bilinear_resize(err.astype(jnp.bfloat16), A, Bt)              # (N, H, W) f32


# ---------------------------------------------------------------------------
# Pure-JAX f32 reference (PyTorch-equivalent forward) for a tolerance check.
# ---------------------------------------------------------------------------
def reference_novelty_map(x, w1, b1, w2, b2, k, s):
    N, C, H, W = x.shape
    patches, py, px = extract_patches(x, k, s)
    h = jnp.maximum(patches @ w1 + b1, 0.0)
    y = h @ w2 + b2
    err = jnp.mean((patches - y) ** 2, axis=1).reshape(N, py, px)
    A = jnp.asarray(bilinear_matrix(py, H))
    Bt = jnp.asarray(bilinear_matrix(px, W).T)
    return jnp.einsum("hp,npq,qw->nhw", A, err, Bt)


if __name__ == "__main__":
    # Small deterministic example consistent with the module's forward.
    N, C, H, W = 2, 3, 16, 16
    KS, STRIDE, HID = 4, 2, 32
    D = KS * KS * C

    key = jax.random.PRNGKey(0)
    k_x, k_w1, k_b1, k_w2, k_b2 = jax.random.split(key, 5)
    x = jax.random.normal(k_x, (N, C, H, W), jnp.float32)
    # Synthetic autoencoder parameters (Linear(D,HID) -> ReLU -> Linear(HID,D));
    # the PyTorch module takes ae_model as an external argument.
    w1 = 0.1 * jax.random.normal(k_w1, (D, HID), jnp.float32)
    b1 = 0.1 * jax.random.normal(k_b1, (1, HID), jnp.float32)
    w2 = 0.1 * jax.random.normal(k_w2, (HID, D), jnp.float32)
    b2 = 0.1 * jax.random.normal(k_b2, (1, D), jnp.float32)

    out = novelty_map(x, w1, b1, w2, b2, KS, STRIDE)
    out = jax.block_until_ready(out)
    assert out.shape == (N, H, W), out.shape
    assert out.dtype == jnp.float32

    ref = jax.block_until_ready(reference_novelty_map(x, w1, b1, w2, b2, KS, STRIDE))
    # bf16 matmul/resize operands shift values slightly; f32 accumulation keeps it ~1%.
    assert jnp.allclose(out, ref, rtol=5e-2, atol=5e-3), float(jnp.max(jnp.abs(out - ref)))
    print("KERNEL_OK")
</pallas_src>

<mosaic_0001>
module attributes {stable_mosaic.version = 11 : i64} {
  func.func @ae_mse_kernel(%arg0: i32, %arg1: memref<128x48xbf16, #tpu.memory_space<vmem>>, %arg2: memref<48x128xbf16, #tpu.memory_space<vmem>>, %arg3: memref<1x128xf32, #tpu.memory_space<vmem>>, %arg4: memref<128x48xbf16, #tpu.memory_space<vmem>>, %arg5: memref<1x48xf32, #tpu.memory_space<vmem>>, %arg6: memref<1x128xf32, #tpu.memory_space<vmem>>) attributes {dimension_semantics = [#tpu.dimension_semantics<parallel>], iteration_bounds = array<i64: 1>, scalar_prefetch = 0 : i64, scratch_operands = 0 : i64, tpu.core_type = #tpu.core_type<tc>, window_params = [{transform_indices = @transform_0, window_bounds = array<i64: 128, 48>}, {pipeline_mode = #tpu.pipeline_mode<synchronous>, transform_indices = @transform_1, window_bounds = array<i64: 48, 128>}, {pipeline_mode = #tpu.pipeline_mode<synchronous>, transform_indices = @transform_2, window_bounds = array<i64: 1, 128>}, {pipeline_mode = #tpu.pipeline_mode<synchronous>, transform_indices = @transform_3, window_bounds = array<i64: 128, 48>}, {pipeline_mode = #tpu.pipeline_mode<synchronous>, transform_indices = @transform_4, window_bounds = array<i64: 1, 48>}, {transform_indices = @transform_5, window_bounds = array<i64: 1, 128>}]} {
    %c0 = arith.constant 0 : index
    %c0_0 = arith.constant 0 : index
    %0 = vector.load %arg1[%c0, %c0_0] : memref<128x48xbf16, #tpu.memory_space<vmem>>, vector<128x48xbf16>
    %c0_1 = arith.constant 0 : index
    %c0_2 = arith.constant 0 : index
    %1 = vector.load %arg2[%c0_1, %c0_2] : memref<48x128xbf16, #tpu.memory_space<vmem>>, vector<48x128xbf16>
    %cst = arith.constant dense<0.000000e+00> : vector<128x128xf32>
    %2 = tpu.matmul %0, %1, %cst {dimension_numbers = #tpu.dot_dimension_numbers<[1], [0], [0], [1], [0, 0, 1, 1], [], []>} : vector<128x48xbf16>, vector<48x128xbf16>, vector<128x128xf32> -> vector<128x128xf32>
    %c0_3 = arith.constant 0 : index
    %c0_4 = arith.constant 0 : index
    %3 = vector.load %arg3[%c0_3, %c0_4] : memref<1x128xf32, #tpu.memory_space<vmem>>, vector<1x128xf32>
    %4 = vector.broadcast %3 : vector<1x128xf32> to vector<128x128xf32>
    %5 = arith.addf %2, %4 : vector<128x128xf32>
    %cst_5 = arith.constant 0.000000e+00 : f32
    %6 = vector.broadcast %cst_5 : f32 to vector<128x128xf32>
    %7 = arith.maximumf %5, %6 : vector<128x128xf32>
    %8 = arith.truncf %7 : vector<128x128xf32> to vector<128x128xbf16>
    %c0_6 = arith.constant 0 : index
    %c0_7 = arith.constant 0 : index
    %9 = vector.load %arg4[%c0_6, %c0_7] : memref<128x48xbf16, #tpu.memory_space<vmem>>, vector<128x48xbf16>
    %cst_8 = arith.constant dense<0.000000e+00> : vector<128x48xf32>
    %10 = tpu.matmul %8, %9, %cst_8 {dimension_numbers = #tpu.dot_dimension_numbers<[1], [0], [0], [1], [0, 0, 1, 1], [], []>} : vector<128x128xbf16>, vector<128x48xbf16>, vector<128x48xf32> -> vector<128x48xf32>
    %c0_9 = arith.constant 0 : index
    %c0_10 = arith.constant 0 : index
    %11 = vector.load %arg5[%c0_9, %c0_10] : memref<1x48xf32, #tpu.memory_space<vmem>>, vector<1x48xf32>
    %12 = vector.broadcast %11 : vector<1x48xf32> to vector<128x48xf32>
    %13 = arith.addf %10, %12 : vector<128x48xf32>
    %14 = arith.extf %0 : vector<128x48xbf16> to vector<128x48xf32>
    %15 = arith.subf %14, %13 : vector<128x48xf32>
    %16 = arith.mulf %15, %15 : vector<128x48xf32>
    %cst_11 = arith.constant dense<0.000000e+00> : vector<128xf32>
    %17 = vector.multi_reduction <add>, %16, %cst_11 [1] : vector<128x48xf32> to vector<128xf32>
    %cst_12 = arith.constant 4.800000e+01 : f32
    %18 = vector.broadcast %cst_12 : f32 to vector<128xf32>
    %19 = arith.divf %17, %18 : vector<128xf32>
    %20 = vector.shape_cast %19 : vector<128xf32> to vector<1x128xf32>
    %c0_13 = arith.constant 0 : index
    %c0_14 = arith.constant 0 : index
    %21 = vector.load %arg6[%c0_13, %c0_14] : memref<1x128xf32, #tpu.memory_space<vmem>>, vector<1x128xf32>
    tpu.vector_store %arg6[%c0_13, %c0_14], %20 {strides = array<i32>} : memref<1x128xf32, #tpu.memory_space<vmem>>, vector<1x128xf32>,
    return
  }
  func.func @transform_0(%arg0: i32) -> (i32, i32) {
    %c0_i32 = arith.constant 0 : i32
    %c0_i32_0 = arith.constant 0 : i32
    return %arg0, %c0_i32 : i32, i32
  }
  func.func @transform_1(%arg0: i32) -> (i32, i32) {
    %c0_i32 = arith.constant 0 : i32
    %c0_i32_0 = arith.constant 0 : i32
    %c0_i32_1 = arith.constant 0 : i32
    return %c0_i32, %c0_i32_0 : i32, i32
  }
  func.func @transform_2(%arg0: i32) -> (i32, i32) {
    %c0_i32 = arith.constant 0 : i32
    %c0_i32_0 = arith.constant 0 : i32
    %c0_i32_1 = arith.constant 0 : i32
    return %c0_i32, %c0_i32_0 : i32, i32
  }
  func.func @transform_3(%arg0: i32) -> (i32, i32) {
    %c0_i32 = arith.constant 0 : i32
    %c0_i32_0 = arith.constant 0 : i32
    %c0_i32_1 = arith.constant 0 : i32
    return %c0_i32, %c0_i32_0 : i32, i32
  }
  func.func @transform_4(%arg0: i32) -> (i32, i32) {
    %c0_i32 = arith.constant 0 : i32
    %c0_i32_0 = arith.constant 0 : i32
    %c0_i32_1 = arith.constant 0 : i32
    return %c0_i32, %c0_i32_0 : i32, i32
  }
  func.func @transform_5(%arg0: i32) -> (i32, i32) {
    %c0_i32 = arith.constant 0 : i32
    %c0_i32_0 = arith.constant 0 : i32
    return %arg0, %c0_i32 : i32, i32
  }
}

</mosaic_0001>

<llo_original>
// kernel: tpu_custom_call.1
$region0: #{tpu_custom_call.1}
  #allocation0 [shape = 'u32[]', space=smem, size = 0x4, offset = 0x4, fixed_abs, tag = 'smem constant byte address 0x4 - core index']
  #allocation1 [shape = 'u32[144,128]{1,0:T(1,128)}', space=vmem, size = 0x12000, scoped, tag = 'internal scratch']
  %s0 = inlined_call_operand.vmem [shape: bf16[128,48], index: 0, kind: input, shape index: {}]
  %s1 = inlined_call_operand.vmem [shape: bf16[48,128], index: 1, kind: input, shape index: {}]
  %s2 = inlined_call_operand.vmem [shape: f32[1,128], index: 2, kind: input, shape index: {}]
  %s3 = inlined_call_operand.vmem [shape: bf16[128,48], index: 3, kind: input, shape index: {}]
  %s4 = inlined_call_operand.vmem [shape: f32[1,48], index: 4, kind: input, shape index: {}]
  %s5 = inlined_call_operand.hbm [shape: f32[1,128], index: 5, kind: output, shape index: {}]
  %s6 = sld [smem:[#allocation0]]
  $region30: #{tpu_custom_call.1} parent=0
    _
  %s8 = ssub.s32 1, %s6
  %s9 = scalar_select 0, %s8, %s6
  $region1: #{tpu_custom_call.1} parent=0
    #allocation2 [shape = 'u8[512]{0}', space=vmem, size = 0x400, scoped, tag = 'output window, operand 0, single buffered']
    #allocation3 [shape = 's32[1]{0}', space=sflag, size = 0x4, scoped, tag = 'scoped memory for tpu_custom_call.1']
    %10 = vsyncpa [#allocation3], 0
    // Predicated region
    $region2: #{tpu_custom_call.1} parent=1 // pred_check
      _
    $region3: #{tpu_custom_call.1} parent=1 // pred_check_branch
      %12 = sbr.rel (0) target = $region5
    $region4: #{tpu_custom_call.1} parent=1 // pred_region
      _
    $region5: #{tpu_custom_call.1} parent=1 // pred_fallthru
      _
    // Predicated region
    $region6: #{tpu_custom_call.1} parent=1 // pred_check
      _
    $region7: #{tpu_custom_call.1} parent=1 // pred_check_branch
      %14 = sbr.rel (0) target = $region9
    $region8: #{tpu_custom_call.1} parent=1 // pred_region
      _
    $region9: #{tpu_custom_call.1} parent=1 // pred_fallthru
      _
    // Predicated region
    $region10: #{tpu_custom_call.1} parent=1 // pred_check
      _
    $region11: #{tpu_custom_call.1} parent=1 // pred_check_branch
      %16 = sbr.rel (0) target = $region13
    $region12: #{tpu_custom_call.1} parent=1 // pred_region
      _
    $region13: #{tpu_custom_call.1} parent=1 // pred_fallthru
      _
    // Predicated region
    $region14: #{tpu_custom_call.1} parent=1 // pred_check
      _
    $region15: #{tpu_custom_call.1} parent=1 // pred_check_branch
      %18 = sbr.rel (0) target = $region17
    $region16: #{tpu_custom_call.1} parent=1 // pred_region
      _
    $region17: #{tpu_custom_call.1} parent=1 // pred_fallthru
      _
    // Predicated region
    $region18: #{tpu_custom_call.1} parent=1 // pred_check
      _
    $region19: #{tpu_custom_call.1} parent=1 // pred_check_branch
      %20 = sbr.rel (0) target = $region21
    $region20: #{tpu_custom_call.1} parent=1 // pred_region
      _
    $region21: #{tpu_custom_call.1} parent=1 // pred_fallthru
      _
    %v22 = vld [vmem:[%s0] sm:$0xf]
    %v23 = vld [vmem:[%s0 + $0x4] sm:$0xf]
    %v24 = vld [vmem:[%s0 + $0x8] sm:$0xf]
    %v25 = vld [vmem:[%s0 + $0xc] sm:$0xf]
    %v26 = vld [vmem:[%s0 + $0x10] sm:$0xf]
    %v27 = vld [vmem:[%s0 + $0x14] sm:$0xf]
    %v28 = vld [vmem:[%s0 + $0x18] sm:$0xf]
    %v29 = vld [vmem:[%s0 + $0x1c] sm:$0xf]
    %v30 = vld [vmem:[%s0 + $0x20] sm:$0xf]
    %v31 = vld [vmem:[%s0 + $0x24] sm:$0xf]
    %v32 = vld [vmem:[%s0 + $0x28] sm:$0xf]
    %v33 = vld [vmem:[%s0 + $0x2c] sm:$0xf]
    %v34 = vld [vmem:[%s0 + $0x30] sm:$0xf]
    %v35 = vld [vmem:[%s0 + $0x34] sm:$0xf]
    %v36 = vld [vmem:[%s0 + $0x38] sm:$0xf]
    %v37 = vld [vmem:[%s0 + $0x3c] sm:$0xf]
    %v38 = vld [vmem:[%s1] sm:$0xf]
    %v39 = vld [vmem:[%s1 + $0x4] sm:$0xf]
    %v40 = vld [vmem:[%s1 + $0x8] sm:$0xf]
    %v41 = vld [vmem:[%s1 + $0xc] sm:$0xf]
    %v42 = vld [vmem:[%s1 + $0x10] sm:$0xf]
    %v43 = vld [vmem:[%s1 + $0x14] sm:$0xf]
    %v44 = vld [vmem:[%s2] sm:$0x1]
    %v46 = vlaneseq
    %v47 = vshrl.u32 %v46, 7
    %v48 = vsub.s32 0, %v47
    %v49 = vrot.slane %v44, %v48
    %v67 = vunpack.c.l.b16 %v22
    %v68 = vunpack.c.l.b16 %v23
    %v69 = vunpack.c.l.b16 %v24
    %v70 = vunpack.c.l.b16 %v25
    %v71 = vunpack.c.l.b16 %v26
    %v72 = vunpack.c.l.b16 %v27
    %v73 = vunpack.c.l.b16 %v28
    %v74 = vunpack.c.l.b16 %v29
    %v75 = vunpack.c.l.b16 %v30
    %v76 = vunpack.c.l.b16 %v31
    %v77 = vunpack.c.l.b16 %v32
    %v78 = vunpack.c.l.b16 %v33
    %v79 = vunpack.c.l.b16 %v34
    %v80 = vunpack.c.l.b16 %v35
    %v81 = vunpack.c.l.b16 %v36
    %v82 = vunpack.c.l.b16 %v37
    %v83 = vpack.c.b16 %v68, %v67
    %v84 = vpack.c.b16 %v70, %v69
    %v85 = vpack.c.b16 %v72, %v71
    %v86 = vpack.c.b16 %v74, %v73
    %v87 = vpack.c.b16 %v76, %v75
    %v88 = vpack.c.b16 %v78, %v77
    %v89 = vpack.c.b16 %v80, %v79
    %v90 = vpack.c.b16 %v82, %v81
    %v97 = vunpack.c.l.b16 %v38
    %v98 = vunpack.c.l.b16 %v39
    %v99 = vunpack.c.l.b16 %v40
    %v100 = vunpack.c.l.b16 %v41
    %v101 = vunpack.c.l.b16 %v42
    %v102 = vunpack.c.l.b16 %v43
    %v103 = vpack.c.b16 %v98, %v97
    %v104 = vpack.c.b16 %v100, %v99
    %v105 = vpack.c.b16 %v102, %v101
    %vm109 = vcmask 392192
    %v111 = vsel %vm109, %v83, 0
    %v114 = vsel %vm109, %v84, 0
    %v117 = vsel %vm109, %v85, 0
    %v120 = vsel %vm109, %v86, 0
    %v123 = vsel %vm109, %v87, 0
    %v126 = vsel %vm109, %v88, 0
    %v129 = vsel %vm109, %v89, 0
    %v132 = vsel %vm109, %v90, 0
    %134 = vmatprep.subr.bf16.mxu0 0
    %135 = vmatpush1.bf16.msra.mxu0 %v103
    %136 = vmatprep.subr.bf16.mxu0 0
    %137 = vmatpush1.bf16.msra.mxu0 %v104
    %138 = vmatprep.subr.bf16.mxu0 0
    %139 = vmatpush1.bf16.msra.mxu0 %v105
    %140 = vmatprep.subr.bf16.mxu0 0
    %141 = vmatpush1.bf16.msra.mxu0 0
    %142 = vmatprep.subr.bf16.mxu0 0
    %143 = vmatpush1.bf16.msra.mxu0 0
    %144 = vmatprep.subr.bf16.mxu0 0
    %145 = vmatpush1.bf16.msra.mxu0 0
    %146 = vmatprep.subr.bf16.mxu0 0
    %147 = vmatpush1.bf16.msra.mxu0 0
    %148 = vmatprep.subr.bf16.mxu0 0
    %149 = vmatpush1.bf16.msra.mxu0 0
    %150 = vmatprep.subr.bf16.mxu0 0
    %151 = vmatpush1.bf16.msra.mxu0 0
    %152 = vmatprep.subr.bf16.mxu0 0
    %153 = vmatpush1.bf16.msra.mxu0 0
    %154 = vmatprep.subr.bf16.mxu0 0
    %155 = vmatpush1.bf16.msra.mxu0 0
    %156 = vmatprep.subr.bf16.mxu0 0
    %157 = vmatpush1.bf16.msra.mxu0 0
    %158 = vmatprep.subr.bf16.mxu0 0
    %159 = vmatpush1.bf16.msra.mxu0 0
    %160 = vmatprep.subr.bf16.mxu0 0
    %161 = vmatpush1.bf16.msra.mxu0 0
    %162 = vmatprep.subr.bf16.mxu0 0
    %163 = vmatpush1.bf16.msra.mxu0 0
    %164 = vmatprep.subr.bf16.mxu0 0
    %165 = vmatpush1.bf16.msra.mxu0 0
    %166 = vmatprep.mubr.bf16.mxu0 0
    %167 = vmatmul.mubr.bf16.gmra.mrb[0].mxu0 %v111
    %v168 = vpop.f32.mrb[0].mxu0
    %v169 = vadd.f32 %v49, %v168
    %v170 = vpop.f32.mrb[0].mxu0
    %v171 = vpop.f32.mrb[0].mxu0
    %v172 = vadd.f32 %v49, %v171
    %v173 = vpop.f32.mrb[0].mxu0
    %174 = vmatprep.mubr.bf16.mxu0 0
    %175 = vmatmul.mubr.bf16.gmra.mrb[0].mxu0 %v114
    %v176 = vpop.f32.mrb[0].mxu0
    %v177 = vadd.f32 %v49, %v176
    %v178 = vpop.f32.mrb[0].mxu0
    %v179 = vpop.f32.mrb[0].mxu0
    %v180 = vadd.f32 %v49, %v179
    %v181 = vpop.f32.mrb[0].mxu0
    %182 = vmatprep.mubr.bf16.mxu0 0
    %183 = vmatmul.mubr.bf16.gmra.mrb[0].mxu0 %v117
    %v184 = vpop.f32.mrb[0].mxu0
    %v185 = vadd.f32 %v49, %v184
    %v186 = vpop.f32.mrb[0].mxu0
    %v187 = vpop.f32.mrb[0].mxu0
    %v188 = vadd.f32 %v49, %v187
    %v189 = vpop.f32.mrb[0].mxu0
    %190 = vmatprep.mubr.bf16.mxu0 0
    %191 = vmatmul.mubr.bf16.gmra.mrb[0].mxu0 %v120
    %v192 = vpop.f32.mrb[0].mxu0
    %v193 = vadd.f32 %v49, %v192
    %v194 = vpop.f32.mrb[0].mxu0
    %v195 = vpop.f32.mrb[0].mxu0
    %v196 = vadd.f32 %v49, %v195
    %v197 = vpop.f32.mrb[0].mxu0
    %198 = vmatprep.mubr.bf16.mxu0 0
    %199 = vmatmul.mubr.bf16.gmra.mrb[0].mxu0 %v123
    %v200 = vpop.f32.mrb[0].mxu0
    %v201 = vadd.f32 %v49, %v200
    %v202 = vpop.f32.mrb[0].mxu0
    %v203 = vpop.f32.mrb[0].mxu0
    %v204 = vadd.f32 %v49, %v203
    %v205 = vpop.f32.mrb[0].mxu0
    %206 = vmatprep.mubr.bf16.mxu0 0
    %207 = vmatmul.mubr.bf16.gmra.mrb[0].mxu0 %v126
    %v208 = vpop.f32.mrb[0].mxu0
    %v209 = vadd.f32 %v49, %v208
    %v210 = vpop.f32.mrb[0].mxu0
    %v211 = vpop.f32.mrb[0].mxu0
    %v212 = vadd.f32 %v49, %v211
    %v213 = vpop.f32.mrb[0].mxu0
    %214 = vmatprep.mubr.bf16.mxu0 0
    %215 = vmatmul.mubr.bf16.gmra.mrb[0].mxu0 %v129
    %v216 = vpop.f32.mrb[0].mxu0
    %v217 = vadd.f32 %v49, %v216
    %v218 = vpop.f32.mrb[0].mxu0
    %v219 = vpop.f32.mrb[0].mxu0
    %v220 = vadd.f32 %v49, %v219
    %v221 = vpop.f32.mrb[0].mxu0
    %222 = vmatprep.mubr.bf16.mxu0 0
    %223 = vmatmul.mubr.bf16.gmra.mrb[0].mxu0 %v132
    %v224 = vpop.f32.mrb[0].mxu0
    %v225 = vadd.f32 %v49, %v224
    %v226 = vpop.f32.mrb[0].mxu0
    %v227 = vpop.f32.mrb[0].mxu0
    %v228 = vadd.f32 %v49, %v227
    %v229 = vpop.f32.mrb[0].mxu0
    %230 = vdwg.mxu0
    %v231 = vmax.f32 %v169, 0.0
    %v232 = vmax.f32 %v172, 0.0
    %v233 = vmax.f32 %v177, 0.0
    %v234 = vmax.f32 %v180, 0.0
    %v235 = vmax.f32 %v185, 0.0
    %v236 = vmax.f32 %v188, 0.0
    %v237 = vmax.f32 %v193, 0.0
    %v238 = vmax.f32 %v196, 0.0
    %v239 = vmax.f32 %v201, 0.0
    %v240 = vmax.f32 %v204, 0.0
    %v241 = vmax.f32 %v209, 0.0
    %v242 = vmax.f32 %v212, 0.0
    %v243 = vmax.f32 %v217, 0.0
    %v244 = vmax.f32 %v220, 0.0
    %v245 = vmax.f32 %v225, 0.0
    %v246 = vmax.f32 %v228, 0.0
    %v247 = vpack.c.bf16 %v232, %v231
    %v248 = vpack.c.bf16 %v234, %v233
    %v249 = vpack.c.bf16 %v236, %v235
    %v250 = vpack.c.bf16 %v238, %v237
    %v251 = vpack.c.bf16 %v240, %v239
    %v252 = vpack.c.bf16 %v242, %v241
    %v253 = vpack.c.bf16 %v244, %v243
    %v254 = vpack.c.bf16 %v246, %v245
    %v255 = vld [vmem:[%s3] sm:$0xf]
    %v256 = vld [vmem:[%s3 + $0x4] sm:$0xf]
    %v257 = vld [vmem:[%s3 + $0x8] sm:$0xf]
    %v258 = vld [vmem:[%s3 + $0xc] sm:$0xf]
    %v259 = vld [vmem:[%s3 + $0x10] sm:$0xf]
    %v260 = vld [vmem:[%s3 + $0x14] sm:$0xf]
    %v261 = vld [vmem:[%s3 + $0x18] sm:$0xf]
    %v262 = vld [vmem:[%s3 + $0x1c] sm:$0xf]
    %v263 = vld [vmem:[%s3 + $0x20] sm:$0xf]
    %v264 = vld [vmem:[%s3 + $0x24] sm:$0xf]
    %v265 = vld [vmem:[%s3 + $0x28] sm:$0xf]
    %v266 = vld [vmem:[%s3 + $0x2c] sm:$0xf]
    %v267 = vld [vmem:[%s3 + $0x30] sm:$0xf]
    %v268 = vld [vmem:[%s3 + $0x34] sm:$0xf]
    %v269 = vld [vmem:[%s3 + $0x38] sm:$0xf]
    %v270 = vld [vmem:[%s3 + $0x3c] sm:$0xf]
    %v271 = vld [vmem:[%s4] sm:$0x1]
    %v273 = vlaneseq
    %v274 = vshrl.u32 %v273, 7
    %v275 = vsub.s32 0, %v274
    %v276 = vrot.slane %v271, %v275
    %v294 = vunpack.c.l.b16 %v255
    %v295 = vunpack.c.l.b16 %v256
    %v296 = vunpack.c.l.b16 %v257
    %v297 = vunpack.c.l.b16 %v258
    %v298 = vunpack.c.l.b16 %v259
    %v299 = vunpack.c.l.b16 %v260
    %v300 = vunpack.c.l.b16 %v261
    %v301 = vunpack.c.l.b16 %v262
    %v302 = vunpack.c.l.b16 %v263
    %v303 = vunpack.c.l.b16 %v264
    %v304 = vunpack.c.l.b16 %v265
    %v305 = vunpack.c.l.b16 %v266
    %v306 = vunpack.c.l.b16 %v267
    %v307 = vunpack.c.l.b16 %v268
    %v308 = vunpack.c.l.b16 %v269
    %v309 = vunpack.c.l.b16 %v270
    %v310 = vpack.c.b16 %v295, %v294
    %v311 = vpack.c.b16 %v297, %v296
    %v312 = vpack.c.b16 %v299, %v298
    %v313 = vpack.c.b16 %v301, %v300
    %v314 = vpack.c.b16 %v303, %v302
    %v315 = vpack.c.b16 %v305, %v304
    %v316 = vpack.c.b16 %v307, %v306
    %v317 = vpack.c.b16 %v309, %v308
    %326 = vmatprep.subr.bf16.mxu0 0
    %327 = vmatpush1.bf16.msra.mxu0 %v310
    %328 = vmatprep.subr.bf16.mxu0 0
    %329 = vmatpush1.bf16.msra.mxu0 %v311
    %330 = vmatprep.subr.bf16.mxu0 0
    %331 = vmatpush1.bf16.msra.mxu0 %v312
    %332 = vmatprep.subr.bf16.mxu0 0
    %333 = vmatpush1.bf16.msra.mxu0 %v313
    %334 = vmatprep.subr.bf16.mxu0 0
    %335 = vmatpush1.bf16.msra.mxu0 %v314
    %336 = vmatprep.subr.bf16.mxu0 0
    %337 = vmatpush1.bf16.msra.mxu0 %v315
    %338 = vmatprep.subr.bf16.mxu0 0
    %339 = vmatpush1.bf16.msra.mxu0 %v316
    %340 = vmatprep.subr.bf16.mxu0 0
    %341 = vmatpush1.bf16.msra.mxu0 %v317
    %342 = vmatprep.subr.bf16.mxu0 0
    %343 = vmatpush1.bf16.msra.mxu0 0
    %344 = vmatprep.subr.bf16.mxu0 0
    %345 = vmatpush1.bf16.msra.mxu0 0
    %346 = vmatprep.subr.bf16.mxu0 0
    %347 = vmatpush1.bf16.msra.mxu0 0
    %348 = vmatprep.subr.bf16.mxu0 0
    %349 = vmatpush1.bf16.msra.mxu0 0
    %350 = vmatprep.subr.bf16.mxu0 0
    %351 = vmatpush1.bf16.msra.mxu0 0
    %352 = vmatprep.subr.bf16.mxu0 0
    %353 = vmatpush1.bf16.msra.mxu0 0
    %354 = vmatprep.subr.bf16.mxu0 0
    %355 = vmatpush1.bf16.msra.mxu0 0
    %356 = vmatprep.subr.bf16.mxu0 0
    %357 = vmatpush1.bf16.msra.mxu0 0
    %358 = vmatprep.mubr.bf16.mxu0 0
    %359 = vmatmul.mubr.bf16.gmra.mrb[0].mxu0 %v247
    %v360 = vpop.f32.mrb[0].mxu0
    %v361 = vadd.f32 %v276, %v360
    %v362 = vpop.f32.mrb[0].mxu0
    %v363 = vpop.f32.mrb[0].mxu0
    %v364 = vadd.f32 %v276, %v363
    %v365 = vpop.f32.mrb[0].mxu0
    %366 = vmatprep.mubr.bf16.mxu0 0
    %367 = vmatmul.mubr.bf16.gmra.mrb[0].mxu0 %v248
    %v368 = vpop.f32.mrb[0].mxu0
    %v369 = vadd.f32 %v276, %v368
    %v370 = vpop.f32.mrb[0].mxu0
    %v371 = vpop.f32.mrb[0].mxu0
    %v372 = vadd.f32 %v276, %v371
    %v373 = vpop.f32.mrb[0].mxu0
    %374 = vmatprep.mubr.bf16.mxu0 0
    %375 = vmatmul.mubr.bf16.gmra.mrb[0].mxu0 %v249
    %v376 = vpop.f32.mrb[0].mxu0
    %v377 = vadd.f32 %v276, %v376
    %v378 = vpop.f32.mrb[0].mxu0
    %v379 = vpop.f32.mrb[0].mxu0
    %v380 = vadd.f32 %v276, %v379
    %v381 = vpop.f32.mrb[0].mxu0
    %382 = vmatprep.mubr.bf16.mxu0 0
    %383 = vmatmul.mubr.bf16.gmra.mrb[0].mxu0 %v250
    %v384 = vpop.f32.mrb[0].mxu0
    %v385 = vadd.f32 %v276, %v384
    %v386 = vpop.f32.mrb[0].mxu0
    %v387 = vpop.f32.mrb[0].mxu0
    %v388 = vadd.f32 %v276, %v387
    %v389 = vpop.f32.mrb[0].mxu0
    %390 = vmatprep.mubr.bf16.mxu0 0
    %391 = vmatmul.mubr.bf16.gmra.mrb[0].mxu0 %v251
    %v392 = vpop.f32.mrb[0].mxu0
    %v393 = vadd.f32 %v276, %v392
    %v394 = vpop.f32.mrb[0].mxu0
    %v395 = vpop.f32.mrb[0].mxu0
    %v396 = vadd.f32 %v276, %v395
    %v397 = vpop.f32.mrb[0].mxu0
    %398 = vmatprep.mubr.bf16.mxu0 0
    %399 = vmatmul.mubr.bf16.gmra.mrb[0].mxu0 %v252
    %v400 = vpop.f32.mrb[0].mxu0
    %v401 = vadd.f32 %v276, %v400
    %v402 = vpop.f32.mrb[0].mxu0
    %v403 = vpop.f32.mrb[0].mxu0
    %v404 = vadd.f32 %v276, %v403
    %v405 = vpop.f32.mrb[0].mxu0
    %406 = vmatprep.mubr.bf16.mxu0 0
    %407 = vmatmul.mubr.bf16.gmra.mrb[0].mxu0 %v253
    %v408 = vpop.f32.mrb[0].mxu0
    %v409 = vadd.f32 %v276, %v408
    %v410 = vpop.f32.mrb[0].mxu0
    %v411 = vpop.f32.mrb[0].mxu0
    %v412 = vadd.f32 %v276, %v411
    %v413 = vpop.f32.mrb[0].mxu0
    %414 = vmatprep.mubr.bf16.mxu0 0
    %415 = vmatmul.mubr.bf16.gmra.mrb[0].mxu0 %v254
    %v416 = vpop.f32.mrb[0].mxu0
    %v417 = vadd.f32 %v276, %v416
    %v418 = vpop.f32.mrb[0].mxu0
    %v419 = vpop.f32.mrb[0].mxu0
    %v420 = vadd.f32 %v276, %v419
    %v421 = vpop.f32.mrb[0].mxu0
    %422 = vdwg.mxu0
    %v423 = vunpack.c.l.bf16 %v22
    %v424 = vunpack.c.l.bf16 %v23
    %v425 = vunpack.c.l.bf16 %v24
    %v426 = vunpack.c.l.bf16 %v25
    %v427 = vunpack.c.l.bf16 %v26
    %v428 = vunpack.c.l.bf16 %v27
    %v429 = vunpack.c.l.bf16 %v28
    %v430 = vunpack.c.l.bf16 %v29
    %v431 = vunpack.c.l.bf16 %v30
    %v432 = vunpack.c.l.bf16 %v31
    %v433 = vunpack.c.l.bf16 %v32
    %v434 = vunpack.c.l.bf16 %v33
    %v435 = vunpack.c.l.bf16 %v34
    %v436 = vunpack.c.l.bf16 %v35
    %v437 = vunpack.c.l.bf16 %v36
    %v438 = vunpack.c.l.bf16 %v37
    %v439 = vsub.f32 %v423, %v361
    %v440 = vsub.f32 %v424, %v364
    %v441 = vsub.f32 %v425, %v369
    %v442 = vsub.f32 %v426, %v372
    %v443 = vsub.f32 %v427, %v377
    %v444 = vsub.f32 %v428, %v380
    %v445 = vsub.f32 %v429, %v385
    %v446 = vsub.f32 %v430, %v388
    %v447 = vsub.f32 %v431, %v393
    %v448 = vsub.f32 %v432, %v396
    %v449 = vsub.f32 %v433, %v401
    %v450 = vsub.f32 %v434, %v404
    %v451 = vsub.f32 %v435, %v409
    %v452 = vsub.f32 %v436, %v412
    %v453 = vsub.f32 %v437, %v417
    %v454 = vsub.f32 %v438, %v420
    %v455 = vmul.f32 %v439, %v439
    %v456 = vmul.f32 %v440, %v440
    %v457 = vmul.f32 %v441, %v441
    %v458 = vmul.f32 %v442, %v442
    %v459 = vmul.f32 %v443, %v443
    %v460 = vmul.f32 %v444, %v444
    %v461 = vmul.f32 %v445, %v445
    %v462 = vmul.f32 %v446, %v446
    %v463 = vmul.f32 %v447, %v447
    %v464 = vmul.f32 %v448, %v448
    %v465 = vmul.f32 %v449, %v449
    %v466 = vmul.f32 %v450, %v450
    %v467 = vmul.f32 %v451, %v451
    %v468 = vmul.f32 %v452, %v452
    %v469 = vmul.f32 %v453, %v453
    %v470 = vmul.f32 %v454, %v454
    %v471 = vsel %vm109, %v455, 0.0
    %472 = vadd.xlane.f32.xlu0 %v471
    %v473 = vpop.xlane.xlu0 %472
    %v474 = vsel %vm109, %v456, 0.0
    %475 = vadd.xlane.f32.xlu0 %v474
    %v476 = vpop.xlane.xlu0 %475
    %v477 = vsel %vm109, %v457, 0.0
    %478 = vadd.xlane.f32.xlu0 %v477
    %v479 = vpop.xlane.xlu0 %478
    %v480 = vsel %vm109, %v458, 0.0
    %481 = vadd.xlane.f32.xlu0 %v480
    %v482 = vpop.xlane.xlu0 %481
    %v483 = vsel %vm109, %v459, 0.0
    %484 = vadd.xlane.f32.xlu0 %v483
    %v485 = vpop.xlane.xlu0 %484
    %v486 = vsel %vm109, %v460, 0.0
    %487 = vadd.xlane.f32.xlu0 %v486
    %v488 = vpop.xlane.xlu0 %487
    %v489 = vsel %vm109, %v461, 0.0
    %490 = vadd.xlane.f32.xlu0 %v489
    %v491 = vpop.xlane.xlu0 %490
    %v492 = vsel %vm109, %v462, 0.0
    %493 = vadd.xlane.f32.xlu0 %v492
    %v494 = vpop.xlane.xlu0 %493
    %v495 = vsel %vm109, %v463, 0.0
    %496 = vadd.xlane.f32.xlu0 %v495
    %v497 = vpop.xlane.xlu0 %496
    %v498 = vsel %vm109, %v464, 0.0
    %499 = vadd.xlane.f32.xlu0 %v498
    %v500 = vpop.xlane.xlu0 %499
    %v501 = vsel %vm109, %v465, 0.0
    %502 = vadd.xlane.f32.xlu0 %v501
    %v503 = vpop.xlane.xlu0 %502
    %v504 = vsel %vm109, %v466, 0.0
    %505 = vadd.xlane.f32.xlu0 %v504
    %v506 = vpop.xlane.xlu0 %505
    %v507 = vsel %vm109, %v467, 0.0
    %508 = vadd.xlane.f32.xlu0 %v507
    %v509 = vpop.xlane.xlu0 %508
    %v510 = vsel %vm109, %v468, 0.0
    %511 = vadd.xlane.f32.xlu0 %v510
    %v512 = vpop.xlane.xlu0 %511
    %v513 = vsel %vm109, %v469, 0.0
    %514 = vadd.xlane.f32.xlu0 %v513
    %v515 = vpop.xlane.xlu0 %514
    %v516 = vsel %vm109, %v470, 0.0
    %517 = vadd.xlane.f32.xlu0 %v516
    %v518 = vpop.xlane.xlu0 %517
    %v519 = vrcp.pop 48.0
    %v520 = vmul.f32 %v473, %v519
    %v521 = vmul.f32 %v476, %v519
    %v522 = vmul.f32 %v479, %v519
    %v523 = vmul.f32 %v482, %v519
    %v524 = vmul.f32 %v485, %v519
    %v525 = vmul.f32 %v488, %v519
    %v526 = vmul.f32 %v491, %v519
    %v527 = vmul.f32 %v494, %v519
    %v528 = vmul.f32 %v497, %v519
    %v529 = vmul.f32 %v500, %v519
    %v530 = vmul.f32 %v503, %v519
    %v531 = vmul.f32 %v506, %v519
    %v532 = vmul.f32 %v509, %v519
    %v533 = vmul.f32 %v512, %v519
    %v534 = vmul.f32 %v515, %v519
    %v535 = vmul.f32 %v518, %v519
    %v552 = vlaneseq
    %v553 = vand.u32 %v552, 127
    %v554 = vlaneseq
    %v555 = vshrl.u32 %v554, 7
    %v556 = vsub.s32 %v553, %v555
    %v557 = vrot.slane %v520, %v556
    %v558 = vadd.s32 %v553, 4294967288
    %v559 = vlaneseq
    %v560 = vshrl.u32 %v559, 7
    %v561 = vsub.s32 %v558, %v560
    %v562 = vrot.slane %v521, %v561
    %vm563 = vcmask 130112
    %v564 = vsel %vm563, %v562, %v557
    %v565 = vadd.s32 %v553, 4294967280
    %v566 = vlaneseq
    %v567 = vshrl.u32 %v566, 7
    %v568 = vsub.s32 %v565, %v567
    %v569 = vrot.slane %v522, %v568
    %vm570 = vcmask 195712
    %v571 = vsel %vm570, %v569, %v564
    %v572 = vadd.s32 %v553, 4294967272
    %v573 = vlaneseq
    %v574 = vshrl.u32 %v573, 7
    %v575 = vsub.s32 %v572, %v574
    %v576 = vrot.slane %v523, %v575
    %vm577 = vcmask 261312
    %v578 = vsel %vm577, %v576, %v571
    %v579 = vadd.s32 %v553, 4294967264
    %v580 = vlaneseq
    %v581 = vshrl.u32 %v580, 7
    %v582 = vsub.s32 %v579, %v581
    %v583 = vrot.slane %v524, %v582
    %vm584 = vcmask 326912
    %v585 = vsel %vm584, %v583, %v578
    %v586 = vadd.s32 %v553, 4294967256
    %v587 = vlaneseq
    %v588 = vshrl.u32 %v587, 7
    %v589 = vsub.s32 %v586, %v588
    %v590 = vrot.slane %v525, %v589
    %vm591 = vcmask 392512
    %v592 = vsel %vm591, %v590, %v585
    %v593 = vadd.s32 %v553, 4294967248
    %v594 = vlaneseq
    %v595 = vshrl.u32 %v594, 7
    %v596 = vsub.s32 %v593, %v595
    %v597 = vrot.slane %v526, %v596
    %vm598 = vcmask 458112
    %v599 = vsel %vm598, %v597, %v592
    %v600 = vadd.s32 %v553, 4294967240
    %v601 = vlaneseq
    %v602 = vshrl.u32 %v601, 7
    %v603 = vsub.s32 %v600, %v602
    %v604 = vrot.slane %v527, %v603
    %vm605 = vcmask 523712
    %v606 = vsel %vm605, %v604, %v599
    %v607 = vadd.s32 %v553, 4294967232
    %v608 = vlaneseq
    %v609 = vshrl.u32 %v608, 7
    %v610 = vsub.s32 %v607, %v609
    %v611 = vrot.slane %v528, %v610
    %vm612 = vcmask 589312
    %v613 = vsel %vm612, %v611, %v606
    %v614 = vadd.s32 %v553, 4294967224
    %v615 = vlaneseq
    %v616 = vshrl.u32 %v615, 7
    %v617 = vsub.s32 %v614, %v616
    %v618 = vrot.slane %v529, %v617
    %vm619 = vcmask 654912
    %v620 = vsel %vm619, %v618, %v613
    %v621 = vadd.s32 %v553, 4294967216
    %v622 = vlaneseq
    %v623 = vshrl.u32 %v622, 7
    %v624 = vsub.s32 %v621, %v623
    %v625 = vrot.slane %v530, %v624
    %vm626 = vcmask 720512
    %v627 = vsel %vm626, %v625, %v620
    %v628 = vadd.s32 %v553, 4294967208
    %v629 = vlaneseq
    %v630 = vshrl.u32 %v629, 7
    %v631 = vsub.s32 %v628, %v630
    %v632 = vrot.slane %v531, %v631
    %vm633 = vcmask 786112
    %v634 = vsel %vm633, %v632, %v627
    %v635 = vadd.s32 %v553, 4294967200
    %v636 = vlaneseq
    %v637 = vshrl.u32 %v636, 7
    %v638 = vsub.s32 %v635, %v637
    %v639 = vrot.slane %v532, %v638
    %vm640 = vcmask 851712
    %v641 = vsel %vm640, %v639, %v634
    %v642 = vadd.s32 %v553, 4294967192
    %v643 = vlaneseq
    %v644 = vshrl.u32 %v643, 7
    %v645 = vsub.s32 %v642, %v644
    %v646 = vrot.slane %v533, %v645
    %vm647 = vcmask 917312
    %v648 = vsel %vm647, %v646, %v641
    %v649 = vadd.s32 %v553, 4294967184
    %v650 = vlaneseq
    %v651 = vshrl.u32 %v650, 7
    %v652 = vsub.s32 %v649, %v651
    %v653 = vrot.slane %v534, %v652
    %vm654 = vcmask 982912
    %v655 = vsel %vm654, %v653, %v648
    %v656 = vadd.s32 %v553, 4294967176
    %v657 = vlaneseq
    %v658 = vshrl.u32 %v657, 7
    %v659 = vsub.s32 %v656, %v658
    %v660 = vrot.slane %v535, %v659
    %vm661 = vcmask 1048512
    %v662 = vsel %vm661, %v660, %v655
    %664 = vst [vmem:[#allocation2] sm:$0x1] %v662
    // Predicated region
    $region22: #{tpu_custom_call.1} parent=1 // pred_check
      _
    $region23: #{tpu_custom_call.1} parent=1 // pred_check_branch
      %666 = sbr.rel (0) target = $region25
    $region24: #{tpu_custom_call.1} parent=1 // pred_region
      %s668 = ssub.s32 16, 16
      %669 = vsyncadd [#allocation3], %s668
      %s671 = sshll.u32 [#allocation2], 4
      %s672 = int_to_ptr.vmem [resolvable:$true] %s671
      %674 = dma.vmem_to_hbm [thread:$0]  %s672, 16, %s5, [#allocation3]
    $region25: #{tpu_custom_call.1} parent=1 // pred_fallthru
      _
    // Predicated region
    $region26: #{tpu_custom_call.1} parent=1 // pred_check
      _
    $region27: #{tpu_custom_call.1} parent=1 // pred_check_branch
      %676 = sbr.rel (0) target = $region29
    $region28: #{tpu_custom_call.1} parent=1 // pred_region
      %677 = dma.done [#allocation3], 16
    $region29: #{tpu_custom_call.1} parent=1 // pred_fallthru
      _
    %678 = vsyncpa [#allocation3], 1

</llo_original>
